<compile_context>
chip_gen: v7x
topology: tpu7x:2x2x1
jax: 0.10.0
libtpu: 0.0.40
codegen_flags: <defaults>
</compile_context>

<pallas_src>
import functools
import math

import jax
import jax.numpy as jnp
import numpy as np
from jax import lax
from jax.experimental import pallas as pl
from jax.experimental.pallas import tpu as pltpu


def _dis_layer_kernel(x_ref, ii_ref, jj_ref, ar_ref, ac_ref,
                      w_ref, b_ref, scal_ref, o_ref, *, C, W, H, local_num):
    # x_ref / o_ref : (TB, C*W*H) f32 VMEM blocks (lane-dense, no sublane pad)
    # ii_ref/jj_ref : (1, WH)  f32 VMEM  -- w / h coordinate of flat k = w*H + h
    # ar_ref/ac_ref : (WH, W) / (WH, H) f32 VMEM -- constant averaging matrices
    # w_ref         : (L*C,) f32 SMEM   b_ref : (L,) f32 SMEM
    # scal_ref      : (3,)   f32 SMEM   = [position_scal, 1/ns0, 1/ns1]
    TB = x_ref.shape[0]
    WH = W * H
    L = local_num

    ps = scal_ref[0]
    inv_ns0 = scal_ref[1]
    inv_ns1 = scal_ref[2]

    ii = ii_ref[...]            # (1, WH)
    jj = jj_ref[...]            # (1, WH)
    A_row = ar_ref[...]         # (WH, W)  mean over h for every w
    A_col = ac_ref[...]         # (WH, H)  mean over w for every h

    xb = x_ref[...]             # (TB, C*WH)

    inv_two_pi = jnp.float32(1.0 / (2.0 * math.pi))
    inv_W = jnp.float32(1.0 / W)
    inv_H = jnp.float32(1.0 / H)
    # W==1 / H==1 -> NaN pdf, zeroed below (matches torch's unbiased std + mask).
    inv_Wm1 = jnp.float32(1.0 / (W - 1)) if W > 1 else jnp.float32(float("inf"))
    inv_Hm1 = jnp.float32(1.0 / (H - 1)) if H > 1 else jnp.float32(float("inf"))

    acc = jnp.zeros((TB, WH), jnp.float32)
    for l in range(L):                                    # local_num is tiny (default 1)
        # 1x1 conv ("embedding"), vectorized over the sub-batch: C scalar FMAs.
        emb = b_ref[l] + w_ref[l * C] * xb[:, :WH]
        for c in range(1, C):
            emb = emb + w_ref[l * C + c] * xb[:, c * WH:(c + 1) * WH]   # (TB, WH)

        # Global-max location; ties resolve to smallest w / smallest h, matching
        # torch's first-occurrence argmax of the per-axis maxima.
        gmax = jnp.max(emb, axis=1, keepdims=True)                      # (TB, 1)
        is_max = emb >= gmax
        i_star = jnp.min(jnp.where(is_max, ii, jnp.float32(W)),
                         axis=1, keepdims=True)                         # (TB, 1) w idx
        j_star = jnp.min(jnp.where(is_max, jj, jnp.float32(H)),
                         axis=1, keepdims=True)                         # (TB, 1) h idx

        # Unbiased std of row-mean / col-mean profiles via batched MXU matmuls.
        row_mean = jnp.dot(emb, A_row, preferred_element_type=jnp.float32)  # (TB, W)
        col_mean = jnp.dot(emb, A_col, preferred_element_type=jnp.float32)  # (TB, H)
        mu_r = jnp.sum(row_mean, axis=1, keepdims=True) * inv_W
        mu_c = jnp.sum(col_mean, axis=1, keepdims=True) * inv_H
        var_r = jnp.sum((row_mean - mu_r) ** 2, axis=1, keepdims=True) * inv_Wm1
        var_c = jnp.sum((col_mean - mu_c) ** 2, axis=1, keepdims=True) * inv_Hm1
        inv_sig0 = lax.rsqrt(var_r) * inv_ns0        # 1/(aa*ns0), EUP, no div/sqrt
        inv_sig1 = lax.rsqrt(var_c) * inv_ns1        # 1/(bb*ns1)

        # Diagonal multivariate-normal pdf, multiplicative form (no logs):
        #   pdf = exp(-0.5*(di^2 + dj^2)) / (2*pi*sig0*sig1)
        di = (ii - i_star) * (ps * inv_sig0)                            # (TB, WH)
        dj = (jj - j_star) * (ps * inv_sig1)
        norm = inv_two_pi * (inv_sig0 * inv_sig1)                       # (TB, 1)
        pdf = norm * jnp.exp(jnp.float32(-0.5) * (di * di + dj * dj))
        pdf = jnp.where(jnp.isnan(pdf), jnp.float32(0.0), pdf)          # pdf[pdf!=pdf]=0
        acc = acc + emb * pdf

    incr = acc * jnp.float32(1.0 / L)                                   # mean over L
    # Broadcast the increment over channels: out[:, c*WH + k] = x + incr[:, k].
    o_ref[...] = xb + jnp.concatenate([incr] * C, axis=1)


def _pick_block_b(B, per_image_bytes, budget_bytes):
    """Largest divisor of B that is sublane-aligned (multiple of 8 or == B),
    fits the VMEM block budget, and (preferably) leaves >= 2 grid steps."""
    divs = [d for d in range(1, B + 1) if B % d == 0]
    aligned = [d for d in divs if d % 8 == 0 or d == B]     # non-empty (d == B)
    cap = max(1, budget_bytes // per_image_bytes)
    fitting = [d for d in aligned if d <= cap] or [min(aligned)]
    two_step = [d for d in fitting if B // d >= 2]
    return max(two_step) if two_step else max(fitting)


def dis_layer_forward(x, weight, bias, normal_scal, position_scal, *,
                      local_num=1, block_b=None):
    B, C, W, H = x.shape
    WH = W * H
    x_flat = x.reshape(B, C * WH).astype(jnp.float32)       # free for contiguous NCHW

    # Host-side constants (hoisted out of the kernel; DMA'd once, stay resident).
    k = np.arange(WH)
    ii_map = jnp.asarray((k // H).astype(np.float32).reshape(1, WH))    # w coordinate
    jj_map = jnp.asarray((k % H).astype(np.float32).reshape(1, WH))     # h coordinate
    a_row = np.zeros((WH, W), np.float32)
    a_row[k, k // H] = 1.0 / H
    a_col = np.zeros((WH, H), np.float32)
    a_col[k, k % H] = 1.0 / W
    a_row = jnp.asarray(a_row)
    a_col = jnp.asarray(a_col)

    w_smem = weight.reshape(local_num * C).astype(jnp.float32)
    b_smem = bias.reshape(local_num).astype(jnp.float32)
    scal = jnp.concatenate([
        position_scal.reshape(1).astype(jnp.float32),
        (1.0 / normal_scal.astype(jnp.float32)).reshape(2),
    ])                                                       # [ps, 1/ns0, 1/ns1]

    # VMEM budgeting: explicit scoped limit (fits v7x's 64 MiB physical VMEM and
    # raises v5e's 16 MiB default).  Block data is double-buffered; the resident
    # constants (A_row/A_col/ii/jj) are subtracted from the budget.
    vmem_limit = 48 * 1024 * 1024
    const_bytes = 2 * 4 * (WH * (W + H) + 2 * 8 * WH)
    headroom = 6 * 1024 * 1024
    block_budget = max(1 << 20, (vmem_limit - headroom - const_bytes) // 2)
    per_image = 2 * C * WH * 4                               # in + out bytes per image
    if block_b is None:
        block_b = _pick_block_b(B, per_image, block_budget)
    TB = block_b
    assert B % TB == 0

    kernel = functools.partial(_dis_layer_kernel, C=C, W=W, H=H,
                               local_num=local_num)
    out_flat = pl.pallas_call(
        kernel,
        out_shape=jax.ShapeDtypeStruct((B, C * WH), jnp.float32),
        grid_spec=pltpu.PrefetchScalarGridSpec(
            num_scalar_prefetch=0,
            grid=(B // TB,),
            in_specs=[
                pl.BlockSpec((TB, C * WH), lambda b: (b, 0)),           # x block
                pl.BlockSpec((1, WH), lambda b: (0, 0)),                # ii (resident)
                pl.BlockSpec((1, WH), lambda b: (0, 0)),                # jj (resident)
                pl.BlockSpec((WH, W), lambda b: (0, 0)),                # A_row (resident)
                pl.BlockSpec((WH, H), lambda b: (0, 0)),                # A_col (resident)
                pl.BlockSpec(memory_space=pltpu.MemorySpace.SMEM),      # weight (L*C,)
                pl.BlockSpec(memory_space=pltpu.MemorySpace.SMEM),      # bias (L,)
                pl.BlockSpec(memory_space=pltpu.MemorySpace.SMEM),      # [ps, 1/ns0, 1/ns1]
            ],
            out_specs=pl.BlockSpec((TB, C * WH), lambda b: (b, 0)),
        ),
        compiler_params=pltpu.CompilerParams(
            dimension_semantics=("parallel",),
            vmem_limit_bytes=vmem_limit,
        ),
    )(x_flat, ii_map, jj_map, a_row, a_col, w_smem, b_smem, scal)
    return out_flat.reshape(B, C, W, H)


def dis_layer_ref(x, weight, bias, normal_scal, position_scal):
    """Pure-JAX reference mirroring the PyTorch forward, for verification."""
    B, C, W, H = x.shape
    emb = jnp.einsum("bcwh,lc->blwh", x, weight) + bias[None, :, None, None]
    row_max = emb.max(axis=3)                       # (B, L, W) max over h
    col_max = emb.max(axis=2)                       # (B, L, H) max over w
    i_star = jnp.argmax(row_max, axis=-1).astype(jnp.float32)   # w index
    j_star = jnp.argmax(col_max, axis=-1).astype(jnp.float32)   # h index
    aa = jnp.std(emb.mean(axis=3), axis=-1, ddof=1)             # (B, L)
    bb = jnp.std(emb.mean(axis=2), axis=-1, ddof=1)
    sig0 = aa * normal_scal[0]
    sig1 = bb * normal_scal[1]
    ps = position_scal[0]
    ii = jnp.arange(W, dtype=jnp.float32)[None, None, :, None]
    jj = jnp.arange(H, dtype=jnp.float32)[None, None, None, :]
    di = (ii - i_star[..., None, None]) * ps / sig0[..., None, None]
    dj = (jj - j_star[..., None, None]) * ps / sig1[..., None, None]
    logp = (-0.5 * (di ** 2 + dj ** 2)
            - jnp.log(sig0)[..., None, None]
            - jnp.log(sig1)[..., None, None]
            - jnp.log(2.0 * jnp.pi))
    pdf = jnp.exp(logp)
    pdf = jnp.where(jnp.isnan(pdf), 0.0, pdf)
    incr = (emb * pdf).mean(axis=1)                 # mean over local_num
    return x + incr[:, None, :, :]


if __name__ == "__main__":
    B, C, W, H = 2, 4, 16, 16
    local_num = 1

    key = jax.random.PRNGKey(0)
    k_x, k_w, k_b, k_ns = jax.random.split(key, 4)

    x = jax.random.normal(k_x, (B, C, W, H), dtype=jnp.float32)
    # Deterministic synthetic parameters (shapes from the module's __init__).
    weight = jax.random.normal(k_w, (local_num, C), dtype=jnp.float32) * 0.3
    bias = jax.random.normal(k_b, (local_num,), dtype=jnp.float32) * 0.1
    normal_scal = jax.random.uniform(k_ns, (2,), dtype=jnp.float32,
                                     minval=0.1, maxval=1.0)   # torch.rand(2)
    position_scal = jnp.ones((1,), dtype=jnp.float32)          # torch.ones(1)

    out = dis_layer_forward(x, weight, bias, normal_scal, position_scal,
                            local_num=local_num)
    out = jax.block_until_ready(out)

    ref = jax.block_until_ready(
        dis_layer_ref(x, weight, bias, normal_scal, position_scal))
    np.testing.assert_allclose(np.asarray(out), np.asarray(ref),
                               rtol=1e-3, atol=3e-4)

    print("KERNEL_OK")
</pallas_src>

<mosaic_0001>
module attributes {stable_mosaic.version = 11 : i64} {
  func.func @_dis_layer_kernel(%arg0: i32, %arg1: memref<2x1024xf32, #tpu.memory_space<vmem>>, %arg2: memref<1x256xf32, #tpu.memory_space<vmem>>, %arg3: memref<1x256xf32, #tpu.memory_space<vmem>>, %arg4: memref<256x16xf32, #tpu.memory_space<vmem>>, %arg5: memref<256x16xf32, #tpu.memory_space<vmem>>, %arg6: memref<4xf32, #tpu.memory_space<smem>>, %arg7: memref<1xf32, #tpu.memory_space<smem>>, %arg8: memref<3xf32, #tpu.memory_space<smem>>, %arg9: memref<2x1024xf32, #tpu.memory_space<vmem>>) attributes {dimension_semantics = [#tpu.dimension_semantics<parallel>], iteration_bounds = array<i64: 1>, scalar_prefetch = 0 : i64, scratch_operands = 0 : i64, tpu.core_type = #tpu.core_type<tc>, window_params = [{transform_indices = @transform_0, window_bounds = array<i64: 2, 1024>}, {pipeline_mode = #tpu.pipeline_mode<synchronous>, transform_indices = @transform_1, window_bounds = array<i64: 1, 256>}, {pipeline_mode = #tpu.pipeline_mode<synchronous>, transform_indices = @transform_2, window_bounds = array<i64: 1, 256>}, {pipeline_mode = #tpu.pipeline_mode<synchronous>, transform_indices = @transform_3, window_bounds = array<i64: 256, 16>}, {pipeline_mode = #tpu.pipeline_mode<synchronous>, transform_indices = @transform_4, window_bounds = array<i64: 256, 16>}, {transform_indices = @transform_5, window_bounds = array<i64: 4>}, {transform_indices = @transform_6, window_bounds = array<i64: 1>}, {transform_indices = @transform_7, window_bounds = array<i64: 3>}, {transform_indices = @transform_8, window_bounds = array<i64: 2, 1024>}]} {
    %c0 = arith.constant 0 : index
    %0 = memref.load %arg8[%c0] : memref<3xf32, #tpu.memory_space<smem>>
    %c1 = arith.constant 1 : index
    %1 = memref.load %arg8[%c1] : memref<3xf32, #tpu.memory_space<smem>>
    %c2 = arith.constant 2 : index
    %2 = memref.load %arg8[%c2] : memref<3xf32, #tpu.memory_space<smem>>
    %c0_0 = arith.constant 0 : index
    %c0_1 = arith.constant 0 : index
    %3 = vector.load %arg2[%c0_0, %c0_1] : memref<1x256xf32, #tpu.memory_space<vmem>>, vector<1x256xf32>
    %c0_2 = arith.constant 0 : index
    %c0_3 = arith.constant 0 : index
    %4 = vector.load %arg3[%c0_2, %c0_3] : memref<1x256xf32, #tpu.memory_space<vmem>>, vector<1x256xf32>
    %c0_4 = arith.constant 0 : index
    %c0_5 = arith.constant 0 : index
    %5 = vector.load %arg4[%c0_4, %c0_5] : memref<256x16xf32, #tpu.memory_space<vmem>>, vector<256x16xf32>
    %c0_6 = arith.constant 0 : index
    %c0_7 = arith.constant 0 : index
    %6 = vector.load %arg5[%c0_6, %c0_7] : memref<256x16xf32, #tpu.memory_space<vmem>>, vector<256x16xf32>
    %c0_8 = arith.constant 0 : index
    %c0_9 = arith.constant 0 : index
    %7 = vector.load %arg1[%c0_8, %c0_9] : memref<2x1024xf32, #tpu.memory_space<vmem>>, vector<2x1024xf32>
    %cst = arith.constant 0.000000e+00 : f32
    %8 = vector.broadcast %cst : f32 to vector<2x256xf32>
    %c0_10 = arith.constant 0 : index
    %9 = memref.load %arg7[%c0_10] : memref<1xf32, #tpu.memory_space<smem>>
    %c0_11 = arith.constant 0 : index
    %10 = memref.load %arg6[%c0_11] : memref<4xf32, #tpu.memory_space<smem>>
    %11 = vector.extract_strided_slice %7 {offsets = [0, 0], sizes = [2, 256], strides = [1, 1]} : vector<2x1024xf32> to vector<2x256xf32>
    %12 = vector.broadcast %10 : f32 to vector<2x256xf32>
    %13 = arith.mulf %12, %11 : vector<2x256xf32>
    %14 = vector.broadcast %9 : f32 to vector<2x256xf32>
    %15 = arith.addf %14, %13 : vector<2x256xf32>
    %c1_12 = arith.constant 1 : index
    %16 = memref.load %arg6[%c1_12] : memref<4xf32, #tpu.memory_space<smem>>
    %17 = vector.extract_strided_slice %7 {offsets = [0, 256], sizes = [2, 256], strides = [1, 1]} : vector<2x1024xf32> to vector<2x256xf32>
    %18 = vector.broadcast %16 : f32 to vector<2x256xf32>
    %19 = arith.mulf %18, %17 : vector<2x256xf32>
    %20 = arith.addf %15, %19 : vector<2x256xf32>
    %c2_13 = arith.constant 2 : index
    %21 = memref.load %arg6[%c2_13] : memref<4xf32, #tpu.memory_space<smem>>
    %22 = vector.extract_strided_slice %7 {offsets = [0, 512], sizes = [2, 256], strides = [1, 1]} : vector<2x1024xf32> to vector<2x256xf32>
    %23 = vector.broadcast %21 : f32 to vector<2x256xf32>
    %24 = arith.mulf %23, %22 : vector<2x256xf32>
    %25 = arith.addf %20, %24 : vector<2x256xf32>
    %c3 = arith.constant 3 : index
    %26 = memref.load %arg6[%c3] : memref<4xf32, #tpu.memory_space<smem>>
    %27 = vector.extract_strided_slice %7 {offsets = [0, 768], sizes = [2, 256], strides = [1, 1]} : vector<2x1024xf32> to vector<2x256xf32>
    %28 = vector.broadcast %26 : f32 to vector<2x256xf32>
    %29 = arith.mulf %28, %27 : vector<2x256xf32>
    %30 = arith.addf %25, %29 : vector<2x256xf32>
    %cst_14 = arith.constant dense<0xFF800000> : vector<2xf32>
    %31 = vector.multi_reduction <maximumf>, %30, %cst_14 [1] : vector<2x256xf32> to vector<2xf32>
    %32 = vector.shape_cast %31 : vector<2xf32> to vector<2x1xf32>
    %33 = vector.broadcast %32 : vector<2x1xf32> to vector<2x256xf32>
    %34 = arith.cmpf oge, %30, %33 : vector<2x256xf32>
    %cst_15 = arith.constant 1.600000e+01 : f32
    %35 = vector.shape_cast %3 : vector<1x256xf32> to vector<1x256xf32>
    %36 = vector.broadcast %35 : vector<1x256xf32> to vector<2x256xf32>
    %37 = vector.broadcast %cst_15 : f32 to vector<2x256xf32>
    %38 = arith.select %34, %36, %37 : vector<2x256xi1>, vector<2x256xf32>
    %cst_16 = arith.constant dense<0x7F800000> : vector<2xf32>
    %39 = vector.multi_reduction <minimumf>, %38, %cst_16 [1] : vector<2x256xf32> to vector<2xf32>
    %40 = vector.shape_cast %39 : vector<2xf32> to vector<2x1xf32>
    %cst_17 = arith.constant 1.600000e+01 : f32
    %41 = vector.shape_cast %4 : vector<1x256xf32> to vector<1x256xf32>
    %42 = vector.broadcast %41 : vector<1x256xf32> to vector<2x256xf32>
    %43 = vector.broadcast %cst_17 : f32 to vector<2x256xf32>
    %44 = arith.select %34, %42, %43 : vector<2x256xi1>, vector<2x256xf32>
    %cst_18 = arith.constant dense<0x7F800000> : vector<2xf32>
    %45 = vector.multi_reduction <minimumf>, %44, %cst_18 [1] : vector<2x256xf32> to vector<2xf32>
    %46 = vector.shape_cast %45 : vector<2xf32> to vector<2x1xf32>
    %cst_19 = arith.constant dense<0.000000e+00> : vector<2x16xf32>
    %47 = tpu.matmul %30, %5, %cst_19 {dimension_numbers = #tpu.dot_dimension_numbers<[1], [0], [0], [1], [0, 0, 1, 1], [], []>} : vector<2x256xf32>, vector<256x16xf32>, vector<2x16xf32> -> vector<2x16xf32>
    %cst_20 = arith.constant dense<0.000000e+00> : vector<2x16xf32>
    %48 = tpu.matmul %30, %6, %cst_20 {dimension_numbers = #tpu.dot_dimension_numbers<[1], [0], [0], [1], [0, 0, 1, 1], [], []>} : vector<2x256xf32>, vector<256x16xf32>, vector<2x16xf32> -> vector<2x16xf32>
    %cst_21 = arith.constant dense<0.000000e+00> : vector<2xf32>
    %49 = vector.multi_reduction <add>, %47, %cst_21 [1] : vector<2x16xf32> to vector<2xf32>
    %50 = vector.shape_cast %49 : vector<2xf32> to vector<2x1xf32>
    %cst_22 = arith.constant 6.250000e-02 : f32
    %51 = vector.broadcast %cst_22 : f32 to vector<2x1xf32>
    %52 = arith.mulf %50, %51 : vector<2x1xf32>
    %cst_23 = arith.constant dense<0.000000e+00> : vector<2xf32>
    %53 = vector.multi_reduction <add>, %48, %cst_23 [1] : vector<2x16xf32> to vector<2xf32>
    %54 = vector.shape_cast %53 : vector<2xf32> to vector<2x1xf32>
    %cst_24 = arith.constant 6.250000e-02 : f32
    %55 = vector.broadcast %cst_24 : f32 to vector<2x1xf32>
    %56 = arith.mulf %54, %55 : vector<2x1xf32>
    %57 = vector.broadcast %52 : vector<2x1xf32> to vector<2x16xf32>
    %58 = arith.subf %47, %57 : vector<2x16xf32>
    %59 = arith.mulf %58, %58 : vector<2x16xf32>
    %cst_25 = arith.constant dense<0.000000e+00> : vector<2xf32>
    %60 = vector.multi_reduction <add>, %59, %cst_25 [1] : vector<2x16xf32> to vector<2xf32>
    %61 = vector.shape_cast %60 : vector<2xf32> to vector<2x1xf32>
    %cst_26 = arith.constant 0.0666666701 : f32
    %62 = vector.broadcast %cst_26 : f32 to vector<2x1xf32>
    %63 = arith.mulf %61, %62 : vector<2x1xf32>
    %64 = vector.broadcast %56 : vector<2x1xf32> to vector<2x16xf32>
    %65 = arith.subf %48, %64 : vector<2x16xf32>
    %66 = arith.mulf %65, %65 : vector<2x16xf32>
    %cst_27 = arith.constant dense<0.000000e+00> : vector<2xf32>
    %67 = vector.multi_reduction <add>, %66, %cst_27 [1] : vector<2x16xf32> to vector<2xf32>
    %68 = vector.shape_cast %67 : vector<2xf32> to vector<2x1xf32>
    %cst_28 = arith.constant 0.0666666701 : f32
    %69 = vector.broadcast %cst_28 : f32 to vector<2x1xf32>
    %70 = arith.mulf %68, %69 : vector<2x1xf32>
    %71 = math.rsqrt %63 : vector<2x1xf32>
    %72 = vector.broadcast %1 : f32 to vector<2x1xf32>
    %73 = arith.mulf %71, %72 : vector<2x1xf32>
    %74 = math.rsqrt %70 : vector<2x1xf32>
    %75 = vector.broadcast %2 : f32 to vector<2x1xf32>
    %76 = arith.mulf %74, %75 : vector<2x1xf32>
    %77 = vector.broadcast %3 : vector<1x256xf32> to vector<2x256xf32>
    %78 = vector.broadcast %40 : vector<2x1xf32> to vector<2x256xf32>
    %79 = arith.subf %77, %78 : vector<2x256xf32>
    %80 = vector.broadcast %0 : f32 to vector<2x1xf32>
    %81 = arith.mulf %80, %73 : vector<2x1xf32>
    %82 = vector.broadcast %81 : vector<2x1xf32> to vector<2x256xf32>
    %83 = arith.mulf %79, %82 : vector<2x256xf32>
    %84 = vector.broadcast %4 : vector<1x256xf32> to vector<2x256xf32>
    %85 = vector.broadcast %46 : vector<2x1xf32> to vector<2x256xf32>
    %86 = arith.subf %84, %85 : vector<2x256xf32>
    %87 = vector.broadcast %0 : f32 to vector<2x1xf32>
    %88 = arith.mulf %87, %76 : vector<2x1xf32>
    %89 = vector.broadcast %88 : vector<2x1xf32> to vector<2x256xf32>
    %90 = arith.mulf %86, %89 : vector<2x256xf32>
    %91 = arith.mulf %73, %76 : vector<2x1xf32>
    %cst_29 = arith.constant 0.159154937 : f32
    %92 = vector.broadcast %cst_29 : f32 to vector<2x1xf32>
    %93 = arith.mulf %92, %91 : vector<2x1xf32>
    %94 = arith.mulf %83, %83 : vector<2x256xf32>
    %95 = arith.mulf %90, %90 : vector<2x256xf32>
    %96 = arith.addf %94, %95 : vector<2x256xf32>
    %cst_30 = arith.constant -5.000000e-01 : f32
    %97 = vector.broadcast %cst_30 : f32 to vector<2x256xf32>
    %98 = arith.mulf %97, %96 : vector<2x256xf32>
    %99 = math.exp %98 : vector<2x256xf32>
    %100 = vector.broadcast %93 : vector<2x1xf32> to vector<2x256xf32>
    %101 = arith.mulf %100, %99 : vector<2x256xf32>
    %102 = arith.cmpf one, %101, %101 : vector<2x256xf32>
    %cst_31 = arith.constant 0.000000e+00 : f32
    %103 = vector.broadcast %cst_31 : f32 to vector<2x256xf32>
    %104 = arith.select %102, %103, %101 : vector<2x256xi1>, vector<2x256xf32>
    %105 = arith.mulf %30, %104 : vector<2x256xf32>
    %106 = arith.addf %8, %105 : vector<2x256xf32>
    %cst_32 = arith.constant 1.000000e+00 : f32
    %107 = vector.broadcast %cst_32 : f32 to vector<2x256xf32>
    %108 = arith.mulf %106, %107 : vector<2x256xf32>
    %109 = tpu.concatenate %108, %108, %108, %108 in 1 : vector<2x256xf32>, vector<2x256xf32>, vector<2x256xf32>, vector<2x256xf32> -> vector<2x1024xf32>
    %110 = arith.addf %7, %109 : vector<2x1024xf32>
    %c0_33 = arith.constant 0 : index
    %c0_34 = arith.constant 0 : index
    %111 = vector.load %arg9[%c0_33, %c0_34] : memref<2x1024xf32, #tpu.memory_space<vmem>>, vector<2x1024xf32>
    tpu.vector_store %arg9[%c0_33, %c0_34], %110 {strides = array<i32>} : memref<2x1024xf32, #tpu.memory_space<vmem>>, vector<2x1024xf32>,
    return
  }
  func.func @transform_0(%arg0: i32) -> (i32, i32) {
    %c0_i32 = arith.constant 0 : i32
    %c0_i32_0 = arith.constant 0 : i32
    return %arg0, %c0_i32 : i32, i32
  }
  func.func @transform_1(%arg0: i32) -> (i32, i32) {
    %c0_i32 = arith.constant 0 : i32
    %c0_i32_0 = arith.constant 0 : i32
    %c0_i32_1 = arith.constant 0 : i32
    return %c0_i32, %c0_i32_0 : i32, i32
  }
  func.func @transform_2(%arg0: i32) -> (i32, i32) {
    %c0_i32 = arith.constant 0 : i32
    %c0_i32_0 = arith.constant 0 : i32
    %c0_i32_1 = arith.constant 0 : i32
    return %c0_i32, %c0_i32_0 : i32, i32
  }
  func.func @transform_3(%arg0: i32) -> (i32, i32) {
    %c0_i32 = arith.constant 0 : i32
    %c0_i32_0 = arith.constant 0 : i32
    %c0_i32_1 = arith.constant 0 : i32
    return %c0_i32, %c0_i32_0 : i32, i32
  }
  func.func @transform_4(%arg0: i32) -> (i32, i32) {
    %c0_i32 = arith.constant 0 : i32
    %c0_i32_0 = arith.constant 0 : i32
    %c0_i32_1 = arith.constant 0 : i32
    return %c0_i32, %c0_i32_0 : i32, i32
  }
  func.func @transform_5(%arg0: i32) -> i32 {
    %c0_i32 = arith.constant 0 : i32
    %c0_i32_0 = arith.constant 0 : i32
    return %c0_i32 : i32
  }
  func.func @transform_6(%arg0: i32) -> i32 {
    %c0_i32 = arith.constant 0 : i32
    %c0_i32_0 = arith.constant 0 : i32
    return %c0_i32 : i32
  }
  func.func @transform_7(%arg0: i32) -> i32 {
    %c0_i32 = arith.constant 0 : i32
    %c0_i32_0 = arith.constant 0 : i32
    return %c0_i32 : i32
  }
  func.func @transform_8(%arg0: i32) -> (i32, i32) {
    %c0_i32 = arith.constant 0 : i32
    %c0_i32_0 = arith.constant 0 : i32
    return %arg0, %c0_i32 : i32, i32
  }
}

</mosaic_0001>

<llo_original>
// kernel: tpu_custom_call.1
$region0: #{tpu_custom_call.1}
  #allocation0 [shape = 'u32[]', space=smem, size = 0x4, offset = 0x4, fixed_abs, tag = 'smem constant byte address 0x4 - core index']
  #allocation1 [shape = 'u32[144,128]{1,0:T(1,128)}', space=vmem, size = 0x12000, scoped, tag = 'internal scratch']
  #allocation2 [shape = 'f32[1]{0:T(128)S(6)}', space=smem, size = 0x200, scoped, tag = 'scoped memory for tpu_custom_call.1']
  %s0 = inlined_call_operand.vmem [shape: f32[2,1024], index: 0, kind: input, shape index: {}]
  %s1 = inlined_call_operand.vmem [shape: f32[1,256], index: 1, kind: input, shape index: {}]
  %s2 = inlined_call_operand.vmem [shape: f32[1,256], index: 2, kind: input, shape index: {}]
  %s3 = inlined_call_operand.vmem [shape: f32[256,16], index: 3, kind: input, shape index: {}]
  %s4 = inlined_call_operand.vmem [shape: f32[256,16], index: 4, kind: input, shape index: {}]
  %s5 = inlined_call_operand.vmem [shape: f32[4], index: 5, kind: input, shape index: {}]
  %s6 = inlined_call_operand.<no memory space> [shape: f32[1], index: 6, kind: input, shape index: {}]
  %s7 = inlined_call_operand.vmem [shape: f32[3], index: 7, kind: input, shape index: {}]
  %s8 = inlined_call_operand.hbm [shape: f32[2,1024], index: 8, kind: output, shape index: {}]
  %s9 = sld [smem:[#allocation0]]
  $region50: #{tpu_custom_call.1} parent=0
    _
  %s11 = ssub.s32 1, %s9
  %s12 = scalar_select 0, %s11, %s9
  %13 = sst [smem:[#allocation2]] %s6
  $region1: #{tpu_custom_call.1} parent=0
    #allocation3 [shape = 'u8[512]{0}', space=smem, size = 0x200, scoped, tag = 'input window, operand 5, single buffered']
    #allocation4 [shape = 's32[1]{0}', space=sflag, size = 0x4, scoped, tag = 'scoped memory for tpu_custom_call.1']
    #allocation5 [shape = 's32[1]{0}', space=sflag, size = 0x4, scoped, tag = 'scoped memory for tpu_custom_call.1']
    #allocation6 [shape = 'u8[512]{0}', space=smem, size = 0x200, scoped, tag = 'input window, operand 7, single buffered']
    #allocation7 [shape = 's32[1]{0}', space=sflag, size = 0x4, scoped, tag = 'scoped memory for tpu_custom_call.1']
    #allocation8 [shape = 'u8[8192]{0}', space=vmem, size = 0x2000, scoped, tag = 'output window, operand 0, single buffered']
    %14 = vsyncpa [#allocation5], 0
    %15 = vsyncpa [#allocation7], 0
    %16 = vsyncpa [#allocation4], 0
    // Predicated region
    $region2: #{tpu_custom_call.1} parent=1 // pred_check
      _
    $region3: #{tpu_custom_call.1} parent=1 // pred_check_branch
      %18 = sbr.rel (0) target = $region5
    $region4: #{tpu_custom_call.1} parent=1 // pred_region
      _
    $region5: #{tpu_custom_call.1} parent=1 // pred_fallthru
      _
    // Predicated region
    $region6: #{tpu_custom_call.1} parent=1 // pred_check
      _
    $region7: #{tpu_custom_call.1} parent=1 // pred_check_branch
      %20 = sbr.rel (0) target = $region9
    $region8: #{tpu_custom_call.1} parent=1 // pred_region
      _
    $region9: #{tpu_custom_call.1} parent=1 // pred_fallthru
      _
    // Predicated region
    $region10: #{tpu_custom_call.1} parent=1 // pred_check
      _
    $region11: #{tpu_custom_call.1} parent=1 // pred_check_branch
      %22 = sbr.rel (0) target = $region13
    $region12: #{tpu_custom_call.1} parent=1 // pred_region
      _
    $region13: #{tpu_custom_call.1} parent=1 // pred_fallthru
      _
    // Predicated region
    $region14: #{tpu_custom_call.1} parent=1 // pred_check
      _
    $region15: #{tpu_custom_call.1} parent=1 // pred_check_branch
      %24 = sbr.rel (0) target = $region17
    $region16: #{tpu_custom_call.1} parent=1 // pred_region
      _
    $region17: #{tpu_custom_call.1} parent=1 // pred_fallthru
      _
    // Predicated region
    $region18: #{tpu_custom_call.1} parent=1 // pred_check
      _
    $region19: #{tpu_custom_call.1} parent=1 // pred_check_branch
      %26 = sbr.rel (0) target = $region21
    $region20: #{tpu_custom_call.1} parent=1 // pred_region
      _
    $region21: #{tpu_custom_call.1} parent=1 // pred_fallthru
      _
    // Predicated region
    $region22: #{tpu_custom_call.1} parent=1 // pred_check
      _
    $region23: #{tpu_custom_call.1} parent=1 // pred_check_branch
      %28 = sbr.rel (0) target = $region25
    $region24: #{tpu_custom_call.1} parent=1 // pred_region
      %s30 = ssub.s32 16, 16
      %31 = vsyncadd [#allocation5], %s30
      %s33 = sshll.u32 %s5, 4
      %s34 = int_to_ptr.vmem [resolvable:$true] %s33
      %36 = dma.vmem_to_smem %s34, 16, [#allocation3], [#allocation5]
    $region25: #{tpu_custom_call.1} parent=1 // pred_fallthru
      _
    // Predicated region
    $region26: #{tpu_custom_call.1} parent=1 // pred_check
      _
    $region27: #{tpu_custom_call.1} parent=1 // pred_check_branch
      %38 = sbr.rel (0) target = $region29
    $region28: #{tpu_custom_call.1} parent=1 // pred_region
      _
    $region29: #{tpu_custom_call.1} parent=1 // pred_fallthru
      _
    // Predicated region
    $region30: #{tpu_custom_call.1} parent=1 // pred_check
      _
    $region31: #{tpu_custom_call.1} parent=1 // pred_check_branch
      %40 = sbr.rel (0) target = $region33
    $region32: #{tpu_custom_call.1} parent=1 // pred_region
      %s42 = ssub.s32 16, 16
      %43 = vsyncadd [#allocation7], %s42
      %s45 = sshll.u32 %s7, 4
      %s46 = int_to_ptr.vmem [resolvable:$true] %s45
      %48 = dma.vmem_to_smem %s46, 16, [#allocation6], [#allocation7]
    $region33: #{tpu_custom_call.1} parent=1 // pred_fallthru
      _
    // Predicated region
    $region34: #{tpu_custom_call.1} parent=1 // pred_check
      _
    $region35: #{tpu_custom_call.1} parent=1 // pred_check_branch
      %50 = sbr.rel (0) target = $region37
    $region36: #{tpu_custom_call.1} parent=1 // pred_region
      %51 = dma.done [#allocation5], 16
    $region37: #{tpu_custom_call.1} parent=1 // pred_fallthru
      _
    // Predicated region
    $region38: #{tpu_custom_call.1} parent=1 // pred_check
      _
    $region39: #{tpu_custom_call.1} parent=1 // pred_check_branch
      %53 = sbr.rel (0) target = $region41
    $region40: #{tpu_custom_call.1} parent=1 // pred_region
      %54 = dma.done [#allocation7], 16
    $region41: #{tpu_custom_call.1} parent=1 // pred_fallthru
      _
    %55 = sfence
    %s56 = sld [smem:[#allocation6]]
    %s57 = sld [smem:[#allocation6 + $0x1]]
    %s58 = sld [smem:[#allocation6 + $0x2]]
    %v59 = vld [vmem:[%s1] sm:$0x3]
    %v60 = vld [vmem:[%s2] sm:$0x3]
    %v61 = vld [vmem:[%s3] sm:$0xff]
    %v62 = vld [vmem:[%s3 + $0x8] sm:$0xff]
    %v63 = vld [vmem:[%s3 + $0x10] sm:$0xff]
    %v64 = vld [vmem:[%s3 + $0x18] sm:$0xff]
    %v65 = vld [vmem:[%s3 + $0x20] sm:$0xff]
    %v66 = vld [vmem:[%s3 + $0x28] sm:$0xff]
    %v67 = vld [vmem:[%s3 + $0x30] sm:$0xff]
    %v68 = vld [vmem:[%s3 + $0x38] sm:$0xff]
    %v69 = vld [vmem:[%s3 + $0x40] sm:$0xff]
    %v70 = vld [vmem:[%s3 + $0x48] sm:$0xff]
    %v71 = vld [vmem:[%s3 + $0x50] sm:$0xff]
    %v72 = vld [vmem:[%s3 + $0x58] sm:$0xff]
    %v73 = vld [vmem:[%s3 + $0x60] sm:$0xff]
    %v74 = vld [vmem:[%s3 + $0x68] sm:$0xff]
    %v75 = vld [vmem:[%s3 + $0x70] sm:$0xff]
    %v76 = vld [vmem:[%s3 + $0x78] sm:$0xff]
    %v77 = vld [vmem:[%s3 + $0x80] sm:$0xff]
    %v78 = vld [vmem:[%s3 + $0x88] sm:$0xff]
    %v79 = vld [vmem:[%s3 + $0x90] sm:$0xff]
    %v80 = vld [vmem:[%s3 + $0x98] sm:$0xff]
    %v81 = vld [vmem:[%s3 + $0xa0] sm:$0xff]
    %v82 = vld [vmem:[%s3 + $0xa8] sm:$0xff]
    %v83 = vld [vmem:[%s3 + $0xb0] sm:$0xff]
    %v84 = vld [vmem:[%s3 + $0xb8] sm:$0xff]
    %v85 = vld [vmem:[%s3 + $0xc0] sm:$0xff]
    %v86 = vld [vmem:[%s3 + $0xc8] sm:$0xff]
    %v87 = vld [vmem:[%s3 + $0xd0] sm:$0xff]
    %v88 = vld [vmem:[%s3 + $0xd8] sm:$0xff]
    %v89 = vld [vmem:[%s3 + $0xe0] sm:$0xff]
    %v90 = vld [vmem:[%s3 + $0xe8] sm:$0xff]
    %v91 = vld [vmem:[%s3 + $0xf0] sm:$0xff]
    %v92 = vld [vmem:[%s3 + $0xf8] sm:$0xff]
    %v93 = vld [vmem:[%s4] sm:$0xff]
    %v94 = vld [vmem:[%s4 + $0x8] sm:$0xff]
    %v95 = vld [vmem:[%s4 + $0x10] sm:$0xff]
    %v96 = vld [vmem:[%s4 + $0x18] sm:$0xff]
    %v97 = vld [vmem:[%s4 + $0x20] sm:$0xff]
    %v98 = vld [vmem:[%s4 + $0x28] sm:$0xff]
    %v99 = vld [vmem:[%s4 + $0x30] sm:$0xff]
    %v100 = vld [vmem:[%s4 + $0x38] sm:$0xff]
    %v101 = vld [vmem:[%s4 + $0x40] sm:$0xff]
    %v102 = vld [vmem:[%s4 + $0x48] sm:$0xff]
    %v103 = vld [vmem:[%s4 + $0x50] sm:$0xff]
    %v104 = vld [vmem:[%s4 + $0x58] sm:$0xff]
    %v105 = vld [vmem:[%s4 + $0x60] sm:$0xff]
    %v106 = vld [vmem:[%s4 + $0x68] sm:$0xff]
    %v107 = vld [vmem:[%s4 + $0x70] sm:$0xff]
    %v108 = vld [vmem:[%s4 + $0x78] sm:$0xff]
    %v109 = vld [vmem:[%s4 + $0x80] sm:$0xff]
    %v110 = vld [vmem:[%s4 + $0x88] sm:$0xff]
    %v111 = vld [vmem:[%s4 + $0x90] sm:$0xff]
    %v112 = vld [vmem:[%s4 + $0x98] sm:$0xff]
    %v113 = vld [vmem:[%s4 + $0xa0] sm:$0xff]
    %v114 = vld [vmem:[%s4 + $0xa8] sm:$0xff]
    %v115 = vld [vmem:[%s4 + $0xb0] sm:$0xff]
    %v116 = vld [vmem:[%s4 + $0xb8] sm:$0xff]
    %v117 = vld [vmem:[%s4 + $0xc0] sm:$0xff]
    %v118 = vld [vmem:[%s4 + $0xc8] sm:$0xff]
    %v119 = vld [vmem:[%s4 + $0xd0] sm:$0xff]
    %v120 = vld [vmem:[%s4 + $0xd8] sm:$0xff]
    %v121 = vld [vmem:[%s4 + $0xe0] sm:$0xff]
    %v122 = vld [vmem:[%s4 + $0xe8] sm:$0xff]
    %v123 = vld [vmem:[%s4 + $0xf0] sm:$0xff]
    %v124 = vld [vmem:[%s4 + $0xf8] sm:$0xff]
    %v125 = vld [vmem:[%s0] sm:$0xff]
    %v126 = vld [vmem:[%s0 + $0x8] sm:$0xff]
    %s127 = sld [smem:[#allocation2]]
    %s128 = sld [smem:[#allocation3]]
    %v129 = vstv %s128
    %v130 = vmul.f32 %v129, %v125
    %v131 = vstv %s127
    %v132 = vadd.f32 %v131, %v130
    %s133 = sld [smem:[#allocation3 + $0x1]]
    %v134 = vstv %s133
    %v136 = vrot.slane %v125, 4
    %v138 = vmul.f32 %v134, %v136
    %v139 = vadd.f32 %v132, %v138
    %s140 = sld [smem:[#allocation3 + $0x2]]
    %v141 = vstv %s140
    %v142 = vmul.f32 %v141, %v126
    %v143 = vadd.f32 %v139, %v142
    %s144 = sld [smem:[#allocation3 + $0x3]]
    %v145 = vstv %s144
    %v147 = vrot.slane %v126, 4
    %v149 = vmul.f32 %v145, %v147
    %v150 = vadd.f32 %v143, %v149
    %v153 = vunpack.c.l.s4 1983009808
    %v154 = vunpack.c.0.s8 %v153
    %v155 = vlaneseq
    %v156 = vshrl.u32 %v155, 7
    %v157 = vsub.s32 %v154, %v156
    %v158 = vrot.slane %v150, %v157
    %v159 = vcombine.high %v158, %v158
    %vm162 = vcmask 1041408
    %v163 = vsel %vm162, %v158, -inf
    %v164 = vsel %vm162, %v159, -inf
    %v165 = vmax.f32 %v163, %v164
    %166 = vmax.xlane.f32.xlu0 %v165
    %v167 = vpop.xlane.xlu0 %166
    %v170 = vunpack.c.l.s4 269488144
    %v171 = vunpack.c.0.s8 %v170
    %v172 = vlaneseq
    %v173 = vshrl.u32 %v172, 7
    %v174 = vsub.s32 %v171, %v173
    %v175 = vrot.slane %v167, %v174
    %vm177 = vcmp.ge.f32.partialorder %v150, %v175
    %v179 = vlaneseq
    %v180 = vshrl.u32 %v179, 7
    %v181 = vsub.s32 0, %v180
    %v182 = vrot.slane %v59, %v181
    %v183 = vlaneseq
    %v184 = vshrl.u32 %v183, 7
    %v185 = vsub.s32 1, %v184
    %v186 = vrot.slane %v59, %v185
    %v189 = vcombine.low %v182, %v186
    %v191 = vunpack.c.l.s4 1983009808
    %v192 = vunpack.c.0.s8 %v191
    %v193 = vlaneseq
    %v194 = vshrl.u32 %v193, 7
    %v195 = vsub.s32 %v192, %v194
    %v196 = vrot.slane %v189, %v195
    %v198 = vsel %vm177, %v196, 16.0
    %v201 = vunpack.c.l.s4 1983009808
    %v202 = vunpack.c.0.s8 %v201
    %v203 = vlaneseq
    %v204 = vshrl.u32 %v203, 7
    %v205 = vsub.s32 %v202, %v204
    %v206 = vrot.slane %v198, %v205
    %v207 = vcombine.high %v206, %v206
    %v210 = vsel %vm162, %v206, inf
    %v211 = vsel %vm162, %v207, inf
    %v212 = vmin.f32 %v210, %v211
    %213 = vmin.xlane.f32.xlu0 %v212
    %v214 = vpop.xlane.xlu0 %213
    %v216 = vlaneseq
    %v217 = vshrl.u32 %v216, 7
    %v218 = vsub.s32 0, %v217
    %v219 = vrot.slane %v60, %v218
    %v220 = vlaneseq
    %v221 = vshrl.u32 %v220, 7
    %v222 = vsub.s32 1, %v221
    %v223 = vrot.slane %v60, %v222
    %v226 = vcombine.low %v219, %v223
    %v228 = vunpack.c.l.s4 1983009808
    %v229 = vunpack.c.0.s8 %v228
    %v230 = vlaneseq
    %v231 = vshrl.u32 %v230, 7
    %v232 = vsub.s32 %v229, %v231
    %v233 = vrot.slane %v226, %v232
    %v235 = vsel %vm177, %v233, 16.0
    %v238 = vunpack.c.l.s4 1983009808
    %v239 = vunpack.c.0.s8 %v238
    %v240 = vlaneseq
    %v241 = vshrl.u32 %v240, 7
    %v242 = vsub.s32 %v239, %v241
    %v243 = vrot.slane %v235, %v242
    %v244 = vcombine.high %v243, %v243
    %v247 = vsel %vm162, %v243, inf
    %v248 = vsel %vm162, %v244, inf
    %v249 = vmin.f32 %v247, %v248
    %250 = vmin.xlane.f32.xlu0 %v249
    %v251 = vpop.xlane.xlu0 %250
    %252 = vmatprep.subr.mxu0 0.0
    %253 = vmatpush1.msra.mxu0 %v61
    %254 = vmatprep.subr.mxu0 0.0
    %255 = vmatpush1.msra.mxu0 %v62
    %256 = vmatprep.subr.mxu0 0.0
    %257 = vmatpush1.msra.mxu0 %v63
    %258 = vmatprep.subr.mxu0 0.0
    %259 = vmatpush1.msra.mxu0 %v64
    %260 = vmatprep.subr.mxu0 0.0
    %261 = vmatpush1.msra.mxu0 %v65
    %262 = vmatprep.subr.mxu0 0.0
    %263 = vmatpush1.msra.mxu0 %v66
    %264 = vmatprep.subr.mxu0 0.0
    %265 = vmatpush1.msra.mxu0 %v67
    %266 = vmatprep.subr.mxu0 0.0
    %267 = vmatpush1.msra.mxu0 %v68
    %268 = vmatprep.subr.mxu0 0.0
    %269 = vmatpush1.msra.mxu0 %v69
    %270 = vmatprep.subr.mxu0 0.0
    %271 = vmatpush1.msra.mxu0 %v70
    %272 = vmatprep.subr.mxu0 0.0
    %273 = vmatpush1.msra.mxu0 %v71
    %274 = vmatprep.subr.mxu0 0.0
    %275 = vmatpush1.msra.mxu0 %v72
    %276 = vmatprep.subr.mxu0 0.0
    %277 = vmatpush1.msra.mxu0 %v73
    %278 = vmatprep.subr.mxu0 0.0
    %279 = vmatpush1.msra.mxu0 %v74
    %280 = vmatprep.subr.mxu0 0.0
    %281 = vmatpush1.msra.mxu0 %v75
    %282 = vmatprep.subr.mxu0 0.0
    %283 = vmatpush1.msra.mxu0 %v76
    %284 = vmatprep.subr.mxu0 0.0
    %285 = vmatpush1.msra.mxu0 %v77
    %286 = vmatprep.subr.mxu0 0.0
    %287 = vmatpush1.msra.mxu0 %v78
    %288 = vmatprep.subr.mxu0 0.0
    %289 = vmatpush1.msra.mxu0 %v79
    %290 = vmatprep.subr.mxu0 0.0
    %291 = vmatpush1.msra.mxu0 %v80
    %292 = vmatprep.subr.mxu0 0.0
    %293 = vmatpush1.msra.mxu0 %v81
    %294 = vmatprep.subr.mxu0 0.0
    %295 = vmatpush1.msra.mxu0 %v82
    %296 = vmatprep.subr.mxu0 0.0
    %297 = vmatpush1.msra.mxu0 %v83
    %298 = vmatprep.subr.mxu0 0.0
    %299 = vmatpush1.msra.mxu0 %v84
    %300 = vmatprep.subr.mxu0 0.0
    %301 = vmatpush1.msra.mxu0 %v85
    %302 = vmatprep.subr.mxu0 0.0
    %303 = vmatpush1.msra.mxu0 %v86
    %304 = vmatprep.subr.mxu0 0.0
    %305 = vmatpush1.msra.mxu0 %v87
    %306 = vmatprep.subr.mxu0 0.0
    %307 = vmatpush1.msra.mxu0 %v88
    %308 = vmatprep.subr.mxu0 0.0
    %309 = vmatpush1.msra.mxu0 %v89
    %310 = vmatprep.subr.mxu0 0.0
    %311 = vmatpush1.msra.mxu0 %v90
    %312 = vmatprep.subr.mxu0 0.0
    %313 = vmatpush1.msra.mxu0 %v91
    %314 = vmatprep.subr.mxu0 0.0
    %315 = vmatpush1.msra.mxu0 %v92
    %316 = vmatprep.mubr.f32.mxu0 %v159
    %317 = vmatmul.mubr.f32.gmra.mrb[0].mxu0 %v158
    %v318 = vpop.f32.mrb[0].mxu0
    %v319 = vadd.f32 0.0, %v318
    %v320 = vpop.f32.mrb[0].mxu0
    %321 = vdwg.mxu0
    %322 = vmatprep.subr.mxu0 0.0
    %323 = vmatpush1.msra.mxu0 %v93
    %324 = vmatprep.subr.mxu0 0.0
    %325 = vmatpush1.msra.mxu0 %v94
    %326 = vmatprep.subr.mxu0 0.0
    %327 = vmatpush1.msra.mxu0 %v95
    %328 = vmatprep.subr.mxu0 0.0
    %329 = vmatpush1.msra.mxu0 %v96
    %330 = vmatprep.subr.mxu0 0.0
    %331 = vmatpush1.msra.mxu0 %v97
    %332 = vmatprep.subr.mxu0 0.0
    %333 = vmatpush1.msra.mxu0 %v98
    %334 = vmatprep.subr.mxu0 0.0
    %335 = vmatpush1.msra.mxu0 %v99
    %336 = vmatprep.subr.mxu0 0.0
    %337 = vmatpush1.msra.mxu0 %v100
    %338 = vmatprep.subr.mxu0 0.0
    %339 = vmatpush1.msra.mxu0 %v101
    %340 = vmatprep.subr.mxu0 0.0
    %341 = vmatpush1.msra.mxu0 %v102
    %342 = vmatprep.subr.mxu0 0.0
    %343 = vmatpush1.msra.mxu0 %v103
    %344 = vmatprep.subr.mxu0 0.0
    %345 = vmatpush1.msra.mxu0 %v104
    %346 = vmatprep.subr.mxu0 0.0
    %347 = vmatpush1.msra.mxu0 %v105
    %348 = vmatprep.subr.mxu0 0.0
    %349 = vmatpush1.msra.mxu0 %v106
    %350 = vmatprep.subr.mxu0 0.0
    %351 = vmatpush1.msra.mxu0 %v107
    %352 = vmatprep.subr.mxu0 0.0
    %353 = vmatpush1.msra.mxu0 %v108
    %354 = vmatprep.subr.mxu0 0.0
    %355 = vmatpush1.msra.mxu0 %v109
    %356 = vmatprep.subr.mxu0 0.0
    %357 = vmatpush1.msra.mxu0 %v110
    %358 = vmatprep.subr.mxu0 0.0
    %359 = vmatpush1.msra.mxu0 %v111
    %360 = vmatprep.subr.mxu0 0.0
    %361 = vmatpush1.msra.mxu0 %v112
    %362 = vmatprep.subr.mxu0 0.0
    %363 = vmatpush1.msra.mxu0 %v113
    %364 = vmatprep.subr.mxu0 0.0
    %365 = vmatpush1.msra.mxu0 %v114
    %366 = vmatprep.subr.mxu0 0.0
    %367 = vmatpush1.msra.mxu0 %v115
    %368 = vmatprep.subr.mxu0 0.0
    %369 = vmatpush1.msra.mxu0 %v116
    %370 = vmatprep.subr.mxu0 0.0
    %371 = vmatpush1.msra.mxu0 %v117
    %372 = vmatprep.subr.mxu0 0.0
    %373 = vmatpush1.msra.mxu0 %v118
    %374 = vmatprep.subr.mxu0 0.0
    %375 = vmatpush1.msra.mxu0 %v119
    %376 = vmatprep.subr.mxu0 0.0
    %377 = vmatpush1.msra.mxu0 %v120
    %378 = vmatprep.subr.mxu0 0.0
    %379 = vmatpush1.msra.mxu0 %v121
    %380 = vmatprep.subr.mxu0 0.0
    %381 = vmatpush1.msra.mxu0 %v122
    %382 = vmatprep.subr.mxu0 0.0
    %383 = vmatpush1.msra.mxu0 %v123
    %384 = vmatprep.subr.mxu0 0.0
    %385 = vmatpush1.msra.mxu0 %v124
    %386 = vmatprep.mubr.f32.mxu0 %v159
    %387 = vmatmul.mubr.f32.gmra.mrb[0].mxu0 %v158
    %v388 = vpop.f32.mrb[0].mxu0
    %v389 = vadd.f32 0.0, %v388
    %v390 = vpop.f32.mrb[0].mxu0
    %391 = vdwg.mxu0
    %vm392 = vcmask 123904
    %v393 = vsel %vm392, %v319, 0.0
    %394 = vadd.xlane.f32.xlu0 %v393
    %v395 = vpop.xlane.xlu0 %394
    %v396 = vmul.f32 %v395, 0.0625
    %v397 = vsel %vm392, %v389, 0.0
    %398 = vadd.xlane.f32.xlu0 %v397
    %v399 = vpop.xlane.xlu0 %398
    %v400 = vmul.f32 %v399, 0.0625
    %v401 = vsub.f32 %v319, %v396
    %v402 = vmul.f32 %v401, %v401
    %v403 = vsel %vm392, %v402, 0.0
    %404 = vadd.xlane.f32.xlu0 %v403
    %v405 = vpop.xlane.xlu0 %404
    %v406 = vmul.f32 %v405, 0.06666667
    %v407 = vsub.f32 %v389, %v400
    %v408 = vmul.f32 %v407, %v407
    %v409 = vsel %vm392, %v408, 0.0
    %410 = vadd.xlane.f32.xlu0 %v409
    %v411 = vpop.xlane.xlu0 %410
    %v412 = vmul.f32 %v411, 0.06666667
    %v413 = vrsqrt.pop %v406
    %v414 = vstv %s57
    %v415 = vmul.f32 %v413, %v414
    %v416 = vrsqrt.pop %v412
    %v417 = vstv %s58
    %v418 = vmul.f32 %v416, %v417
    %v419 = vsub.f32 %v182, %v214
    %v420 = vsub.f32 %v186, %v214
    %v421 = vstv %s56
    %v422 = vmul.f32 %v421, %v415
    %v423 = vmul.f32 %v419, %v422
    %v424 = vmul.f32 %v420, %v422
    %v425 = vsub.f32 %v219, %v251
    %v426 = vsub.f32 %v223, %v251
    %v427 = vmul.f32 %v421, %v418
    %v428 = vmul.f32 %v425, %v427
    %v429 = vmul.f32 %v426, %v427
    %v430 = vmul.f32 %v415, %v418
    %v431 = vmul.f32 %v430, 0.15915494
    %v432 = vmul.f32 %v423, %v423
    %v433 = vmul.f32 %v424, %v424
    %v434 = vmul.f32 %v428, %v428
    %v435 = vmul.f32 %v429, %v429
    %v436 = vadd.f32 %v432, %v434
    %v437 = vadd.f32 %v433, %v435
    %v438 = vmul.f32 %v436, -0.5
    %v439 = vmul.f32 %v437, -0.5
    %v440 = vmul.f32 %v438, 1.442695
    %v441 = vpow.pop %v440
    %v442 = vmul.f32 %v439, 1.442695
    %v443 = vpow.pop %v442
    %v444 = vmul.f32 %v431, %v441
    %v445 = vmul.f32 %v431, %v443
    %vm446 = vcmp.ne.f32.partialorder %v444, %v444
    %vm447 = vcmp.ne.f32.partialorder %v445, %v445
    %v448 = vsel %vm446, 0.0, %v444
    %v449 = vsel %vm447, 0.0, %v445
    %v452 = vcombine.low %v448, %v449
    %v454 = vunpack.c.l.s4 1983009808
    %v455 = vunpack.c.0.s8 %v454
    %v456 = vlaneseq
    %v457 = vshrl.u32 %v456, 7
    %v458 = vsub.s32 %v455, %v457
    %v459 = vrot.slane %v452, %v458
    %v461 = vmul.f32 %v150, %v459
    %v462 = vadd.f32 %v461, 0.0
    %v465 = vunpack.c.l.s4 1983009808
    %v466 = vunpack.c.0.s8 %v465
    %v467 = vlaneseq
    %v468 = vshrl.u32 %v467, 7
    %v469 = vsub.s32 %v466, %v468
    %v470 = vrot.slane %v462, %v469
    %v471 = vcombine.high %v470, %v470
    %v472 = vcombine.low %v470, %v471
    %v474 = vunpack.c.l.s4 1983009808
    %v475 = vunpack.c.0.s8 %v474
    %v476 = vlaneseq
    %v477 = vshrl.u32 %v476, 7
    %v478 = vsub.s32 %v475, %v477
    %v479 = vrot.slane %v472, %v478
    %v480 = vcombine.low %v479, %v479
    %v482 = vadd.f32 %v125, %v480
    %v483 = vadd.f32 %v126, %v480
    %484 = vst [vmem:[#allocation8] sm:$0xff] %v482
    %485 = vst [vmem:[#allocation8 + $0x8] sm:$0xff] %v483
    // Predicated region
    $region42: #{tpu_custom_call.1} parent=1 // pred_check
      _
    $region43: #{tpu_custom_call.1} parent=1 // pred_check_branch
      %487 = sbr.rel (0) target = $region45
    $region44: #{tpu_custom_call.1} parent=1 // pred_region
      %s489 = ssub.s32 256, 256
      %490 = vsyncadd [#allocation4], %s489
      %s492 = sshll.u32 [#allocation8], 4
      %s493 = int_to_ptr.vmem [resolvable:$true] %s492
      %495 = dma.vmem_to_hbm [thread:$0]  %s493, 256, %s8, [#allocation4]
    $region45: #{tpu_custom_call.1} parent=1 // pred_fallthru
      _
    // Predicated region
    $region46: #{tpu_custom_call.1} parent=1 // pred_check
      _
    $region47: #{tpu_custom_call.1} parent=1 // pred_check_branch
      %497 = sbr.rel (0) target = $region49
    $region48: #{tpu_custom_call.1} parent=1 // pred_region
      %498 = dma.done [#allocation4], 256
    $region49: #{tpu_custom_call.1} parent=1 // pred_fallthru
      _
    %499 = vsyncpa [#allocation4], 1
    %500 = vsyncpa [#allocation5], 1
    %501 = vsyncpa [#allocation7], 1

</llo_original>
